<compile_context>
chip_gen: v7x
topology: tpu7x:2x2x1
jax: 0.10.0
libtpu: 0.0.40
codegen_flags: <defaults>
</compile_context>

<pallas_src>
import functools
import math

import jax
import jax.numpy as jnp
from jax.experimental import pallas as pl
from jax.experimental.pallas import tpu as pltpu


def _cdiv(a, b):
    return -(-a // b)


def _round_up(x, n):
    return ((x + n - 1) // n) * n


def _round_down(x, n):
    return (x // n) * n


def _vmem_limit_bytes():
    """Generation-aware scoped-VMEM limit (v5e/v6e: 128 MiB phys, v7x: 64 MiB)."""
    cap = 64 * 1024 * 1024
    try:
        cap = int(getattr(pltpu.get_tpu_info(), "vmem_capacity_bytes", cap))
    except Exception:
        pass
    return max(16 * 1024 * 1024, min((cap * 3) // 4, 96 * 1024 * 1024))


# --------------------------------------------------------------------------
# Kernel A (dense): (N, C, S, 128) layout — classes non-minor, positions fill
# full (sublane, lane) vregs.
# --------------------------------------------------------------------------
def _ce_dense_kernel(logits_ref, labels_ref, out_ref, acc_ref, *,
                     s, s_tile, t_per_p, needs_mask):
    p = pl.program_id(1)
    t = pl.program_id(2)

    @pl.when(t == 0)
    def _():
        acc_ref[...] = jnp.zeros_like(acc_ref)

    x = logits_ref[...].astype(jnp.float32)            # (1, C, St, 128)
    lab = labels_ref[...].astype(jnp.int32)            # (1, 1, St, 128)

    # Numerically stable log-softmax pieces; class axis (1) is non-minor so
    # these reductions are plain elementwise VPU ops across class slices.
    cls_max = jnp.max(x, axis=1, keepdims=True)        # (1, 1, St, 128)
    shifted = x - cls_max                               # (1, C, St, 128)
    sum_exp = jnp.sum(jnp.exp(shifted), axis=1, keepdims=True)

    cls_ids = jax.lax.broadcasted_iota(jnp.int32, x.shape, 1)
    picked = jnp.sum(jnp.where(cls_ids == lab, shifted, 0.0),
                     axis=1, keepdims=True)             # (1, 1, St, 128)

    losses = jnp.log(sum_exp) - picked                  # (1, 1, St, 128)

    if needs_mask:
        # Only the globally-last tile is partial; mask only there (use a
        # select, NOT a multiply, so OOB garbage/NaN never reaches the acc).
        last_p = pl.num_programs(1) - 1
        last_t = pl.num_programs(2) - 1
        is_tail = jnp.logical_and(p == last_p, t == last_t)

        @pl.when(is_tail)
        def _():
            global_t = p * t_per_p + t
            row_ids = (jax.lax.broadcasted_iota(jnp.int32, losses.shape, 2)
                       + global_t * s_tile)
            acc_ref[...] += jnp.where(row_ids < s, losses, 0.0)

        @pl.when(jnp.logical_not(is_tail))
        def _():
            acc_ref[...] += losses
    else:
        acc_ref[...] += losses

    @pl.when(t == pl.num_programs(2) - 1)
    def _():
        out_ref[...] = jnp.sum(acc_ref[...]).reshape(1, 1, 1, 1)


# --------------------------------------------------------------------------
# Kernel A (strip fallback): (N, C, HW) layout, used when HW % 128 != 0.
# --------------------------------------------------------------------------
def _ce_strip_kernel(logits_ref, labels_ref, out_ref, acc_ref, *,
                     hw, tile_hw, needs_mask):
    t = pl.program_id(1)

    @pl.when(t == 0)
    def _():
        acc_ref[...] = jnp.zeros_like(acc_ref)

    x = logits_ref[...].astype(jnp.float32)            # (1, C, T)
    lab = labels_ref[...].astype(jnp.int32)            # (1, 1, T)

    cls_max = jnp.max(x, axis=1, keepdims=True)
    shifted = x - cls_max
    sum_exp = jnp.sum(jnp.exp(shifted), axis=1, keepdims=True)

    cls_ids = jax.lax.broadcasted_iota(jnp.int32, x.shape, 1)
    picked = jnp.sum(jnp.where(cls_ids == lab, shifted, 0.0),
                     axis=1, keepdims=True)

    losses = jnp.log(sum_exp) - picked                  # (1, 1, T)

    if needs_mask:
        last_t = pl.num_programs(1) - 1

        @pl.when(t == last_t)
        def _():
            col_ids = (jax.lax.broadcasted_iota(jnp.int32, losses.shape, 2)
                       + t * tile_hw)
            acc_ref[...] += jnp.sum(
                jnp.where(col_ids < hw, losses, 0.0)).reshape(1, 1, 1)

        @pl.when(t < last_t)
        def _():
            acc_ref[...] += jnp.sum(losses).reshape(1, 1, 1)
    else:
        acc_ref[...] += jnp.sum(losses).reshape(1, 1, 1)

    @pl.when(t == pl.num_programs(1) - 1)
    def _():
        out_ref[...] = acc_ref[...]


def _ce_spatial(pre, label, *, s_tile=None, tile_hw=None):
    n, c = pre.shape[0], pre.shape[1]
    hw = math.prod(pre.shape[2:])

    itemsize = jnp.dtype(pre.dtype).itemsize
    limit = _vmem_limit_bytes()
    budget = limit // 2
    # Per-position footprint: logits (2 pipelined buffers + ~3 f32 temps),
    # labels (2 buffers), losses/sum_exp/acc.
    per_pos = c * (2 * itemsize + 3 * 4) + 2 * 4 + 4 * 4

    if hw % 128 == 0 and hw > 0:
        # Dense path: spatial -> (S, 128), contiguous (free) reshape.
        s = hw // 128
        logits = pre.reshape(n, c, s, 128)
        labels = label.astype(jnp.int32).reshape(n, 1, s, 128)

        if s_tile is None:
            max_s = max(8, budget // (128 * per_pos))
            s_tile = s if s <= max_s else _round_down(max_s, 8)
        num_t = _cdiv(s, s_tile)
        needs_mask = (s % s_tile) != 0

        # Split spatial tiles across a second "parallel" axis so v7x's second
        # TensorCore has work even when N == 1.
        if num_t % 2 == 0 and num_t >= 4:
            num_p, t_per_p = 2, num_t // 2
        else:
            num_p, t_per_p = 1, num_t

        partials = pl.pallas_call(
            functools.partial(_ce_dense_kernel, s=s, s_tile=s_tile,
                              t_per_p=t_per_p, needs_mask=needs_mask),
            out_shape=jax.ShapeDtypeStruct((n, num_p, 1, 1), jnp.float32),
            grid=(n, num_p, t_per_p),
            in_specs=[
                pl.BlockSpec((1, c, s_tile, 128),
                             lambda i, p, t: (i, 0, p * t_per_p + t, 0)),
                pl.BlockSpec((1, 1, s_tile, 128),
                             lambda i, p, t: (i, 0, p * t_per_p + t, 0)),
            ],
            out_specs=pl.BlockSpec((1, 1, 1, 1), lambda i, p, t: (i, p, 0, 0)),
            scratch_shapes=[pltpu.VMEM((1, 1, s_tile, 128), jnp.float32)],
            compiler_params=pltpu.CompilerParams(
                dimension_semantics=("parallel", "parallel", "arbitrary"),
                vmem_limit_bytes=limit),
        )(logits, labels)
    else:
        # Strip fallback: classes on sublanes, spatial on lanes.
        logits = pre.reshape(n, c, hw)
        labels = label.astype(jnp.int32).reshape(n, 1, hw)

        if tile_hw is None:
            max_hw = max(128, budget // per_pos)
            tile_hw = hw if hw <= max_hw else _round_down(max_hw, 128)
        num_t = _cdiv(hw, tile_hw)
        needs_mask = (hw % tile_hw) != 0

        partials = pl.pallas_call(
            functools.partial(_ce_strip_kernel, hw=hw, tile_hw=tile_hw,
                              needs_mask=needs_mask),
            out_shape=jax.ShapeDtypeStruct((n, 1, 1), jnp.float32),
            grid=(n, num_t),
            in_specs=[
                pl.BlockSpec((1, c, tile_hw), lambda i, t: (i, 0, t)),
                pl.BlockSpec((1, 1, tile_hw), lambda i, t: (i, 0, t)),
            ],
            out_specs=pl.BlockSpec((1, 1, 1), lambda i, t: (i, 0, 0)),
            scratch_shapes=[pltpu.VMEM((1, 1, 1), jnp.float32)],
            compiler_params=pltpu.CompilerParams(
                dimension_semantics=("parallel", "arbitrary"),
                vmem_limit_bytes=limit),
        )(logits, labels)

    return jnp.sum(partials) / jnp.float32(n * hw)


# --------------------------------------------------------------------------
# Kernel B: flat (M, C) layout for 2-D inputs — scalar partial accumulation.
# --------------------------------------------------------------------------
def _ce_rows_kernel(logits_ref, labels_ref, out_ref, acc_ref, *,
                    m, tile_m, needs_mask):
    i = pl.program_id(0)

    @pl.when(i == 0)
    def _():
        acc_ref[...] = jnp.zeros_like(acc_ref)

    x = logits_ref[...].astype(jnp.float32)            # (Tm, C)
    lab = labels_ref[...].astype(jnp.int32)            # (Tm, 1)

    row_max = jnp.max(x, axis=-1, keepdims=True)
    shifted = x - row_max
    sum_exp = jnp.sum(jnp.exp(shifted), axis=-1, keepdims=True)

    cls_ids = jax.lax.broadcasted_iota(jnp.int32, (1, x.shape[-1]), 1)
    picked = jnp.sum(jnp.where(cls_ids == lab, shifted, 0.0),
                     axis=-1, keepdims=True)

    losses = jnp.log(sum_exp) - picked                  # (Tm, 1)

    if needs_mask:
        last_i = pl.num_programs(0) - 1

        @pl.when(i == last_i)
        def _():
            row_ids = (jax.lax.broadcasted_iota(jnp.int32, losses.shape, 0)
                       + i * tile_m)
            acc_ref[...] += jnp.sum(
                jnp.where(row_ids < m, losses, 0.0)).reshape(1, 1)

        @pl.when(i < last_i)
        def _():
            acc_ref[...] += jnp.sum(losses).reshape(1, 1)
    else:
        acc_ref[...] += jnp.sum(losses).reshape(1, 1)

    @pl.when(i == pl.num_programs(0) - 1)
    def _():
        out_ref[...] = acc_ref[...]


def _ce_rows(logits, label, *, tile_m=None):
    m, c = logits.shape
    labels = label.astype(jnp.int32).reshape(m, 1)

    itemsize = jnp.dtype(logits.dtype).itemsize
    limit = _vmem_limit_bytes()
    budget = limit // 2
    c_pad = _round_up(c, 128)          # VMEM pads the lane (last) dim to 128
    per_row = c_pad * (2 * itemsize + 3 * 4) + 8 * 4

    if tile_m is None:
        max_m = max(8, budget // per_row)
        tile_m = m if m <= max_m else _round_down(min(max_m, 4096), 8)
    num_i = _cdiv(m, tile_m)
    needs_mask = (m % tile_m) != 0

    total = pl.pallas_call(
        functools.partial(_ce_rows_kernel, m=m, tile_m=tile_m,
                          needs_mask=needs_mask),
        out_shape=jax.ShapeDtypeStruct((1, 1), jnp.float32),
        grid=(num_i,),
        in_specs=[
            pl.BlockSpec((tile_m, c), lambda i: (i, 0)),
            pl.BlockSpec((tile_m, 1), lambda i: (i, 0)),
        ],
        out_specs=pl.BlockSpec((1, 1), lambda i: (0, 0)),
        scratch_shapes=[pltpu.VMEM((1, 1), jnp.float32)],
        compiler_params=pltpu.CompilerParams(
            dimension_semantics=("arbitrary",),
            vmem_limit_bytes=limit),
    )(logits, labels)

    return total[0, 0] / jnp.float32(m)


# --------------------------------------------------------------------------
# Public wrapper == CrossEntropyLoss.forward(pre, label)
# --------------------------------------------------------------------------
@jax.jit
def cross_entropy_loss(pre, label):
    """F.cross_entropy(pre, label), mean reduction.

    pre:   (N, C) or (N, C, *spatial) float logits (f32 or bf16)
    label: (N,)   or (N, *spatial)    integer class indices
    """
    if pre.ndim == 2:
        return _ce_rows(pre, label)
    return _ce_spatial(pre, label)


def _reference_ce(pre, label):
    """Pure-JAX reference matching F.cross_entropy semantics."""
    if pre.ndim > 2:
        c = pre.shape[1]
        logits = jnp.moveaxis(pre, 1, -1).reshape(-1, c)
        labels = label.reshape(-1)
    else:
        logits, labels = pre, label
    logp = jax.nn.log_softmax(logits.astype(jnp.float32), axis=-1)
    nll = -jnp.take_along_axis(logp, labels[:, None].astype(jnp.int32), axis=-1)[:, 0]
    return jnp.mean(nll)


def _check(got, want, name):
    got = jax.block_until_ready(got)
    assert jnp.allclose(got, want, atol=1e-4, rtol=1e-4), (name, got, want)


if __name__ == "__main__":
    key = jax.random.PRNGKey(0)
    keys = jax.random.split(key, 14)

    # 1) NCHW logits + spatial labels (segmentation, small C) -> dense path.
    N, C, H, W = 2, 4, 16, 16
    pre = jax.random.normal(keys[0], (N, C, H, W), dtype=jnp.float32)
    label = jax.random.randint(keys[1], (N, H, W), 0, C, dtype=jnp.int32)
    _check(cross_entropy_loss(pre, label), _reference_ce(pre, label), "dense")

    # 2) Flat (M, C) logits + (M,) labels -> rows path.
    M2, C2 = 64, 32
    pre2 = jax.random.normal(keys[2], (M2, C2), dtype=jnp.float32)
    label2 = jax.random.randint(keys[3], (M2,), 0, C2, dtype=jnp.int32)
    _check(cross_entropy_loss(pre2, label2), _reference_ce(pre2, label2), "rows")

    # 3) bf16 logits, spatial size not a multiple of 128 -> strip fallback.
    pre3 = jax.random.normal(keys[4], (2, 6, 10, 13), dtype=jnp.bfloat16)
    label3 = jax.random.randint(keys[5], (2, 10, 13), 0, 6, dtype=jnp.int32)
    _check(cross_entropy_loss(pre3, label3), _reference_ce(pre3, label3), "strip-bf16")

    # 4) Dense path, forced multi-tile with a partial (masked) tail tile.
    pre4 = jax.random.normal(keys[6], (1, 3, 24, 128), dtype=jnp.float32)
    label4 = jax.random.randint(keys[7], (1, 24, 128), 0, 3, dtype=jnp.int32)
    _check(_ce_spatial(pre4, label4, s_tile=16), _reference_ce(pre4, label4),
           "dense-masked")

    # 5) Dense path, forced 2-way parallel spatial split (v7x path) + mask.
    pre5 = jax.random.normal(keys[8], (1, 3, 30, 128), dtype=jnp.float32)
    label5 = jax.random.randint(keys[9], (1, 30, 128), 0, 3, dtype=jnp.int32)
    _check(_ce_spatial(pre5, label5, s_tile=8), _reference_ce(pre5, label5),
           "dense-split")

    # 6) Rows path, forced multi-tile with masked tail.
    pre6 = jax.random.normal(keys[10], (40, 16), dtype=jnp.float32)
    label6 = jax.random.randint(keys[11], (40,), 0, 16, dtype=jnp.int32)
    _check(_ce_rows(pre6, label6, tile_m=16), _reference_ce(pre6, label6),
           "rows-masked")

    # 7) Strip path, forced multi-tile with masked tail.
    pre7 = jax.random.normal(keys[12], (1, 3, 10, 20), dtype=jnp.float32)
    label7 = jax.random.randint(keys[13], (1, 10, 20), 0, 3, dtype=jnp.int32)
    _check(_ce_spatial(pre7, label7, tile_hw=128), _reference_ce(pre7, label7),
           "strip-masked")

    print("KERNEL_OK")
</pallas_src>

<mosaic_0001>
module attributes {stable_mosaic.version = 11 : i64} {
  func.func @_ce_dense_kernel(%arg0: i32, %arg1: i32, %arg2: i32, %arg3: memref<1x4x2x128xf32, #tpu.memory_space<vmem>>, %arg4: memref<1x1x2x128xi32, #tpu.memory_space<vmem>>, %arg5: memref<1x1x1x1xf32, #tpu.memory_space<vmem>>, %arg6: memref<1x1x2x128xf32, #tpu.memory_space<vmem>>) attributes {dimension_semantics = [#tpu.dimension_semantics<parallel>, #tpu.dimension_semantics<parallel>, #tpu.dimension_semantics<arbitrary>], iteration_bounds = array<i64: 2, 1, 1>, scalar_prefetch = 0 : i64, scratch_operands = 1 : i64, tpu.core_type = #tpu.core_type<tc>, window_params = [{transform_indices = @transform_0, window_bounds = array<i64: 1, 4, 2, 128>}, {transform_indices = @transform_1, window_bounds = array<i64: 1, 1, 2, 128>}, {transform_indices = @transform_2, window_bounds = array<i64: 1, 1, 1, 1>}]} {
    %c0_i32 = arith.constant 0 : i32
    %0 = arith.cmpi eq, %arg2, %c0_i32 : i32
    %1 = arith.extui %0 : i1 to i32
    %c0_i32_0 = arith.constant 0 : i32
    %2 = arith.cmpi ne, %1, %c0_i32_0 : i32
    scf.if %2 {
      %cst_21 = arith.constant 0.000000e+00 : f32
      %27 = vector.broadcast %cst_21 : f32 to vector<1x1x2x128xf32>
      %c0_22 = arith.constant 0 : index
      %c0_23 = arith.constant 0 : index
      %c0_24 = arith.constant 0 : index
      %c0_25 = arith.constant 0 : index
      %28 = vector.load %arg6[%c0_22, %c0_23, %c0_24, %c0_25] : memref<1x1x2x128xf32, #tpu.memory_space<vmem>>, vector<1x1x2x128xf32>
      tpu.vector_store %arg6[%c0_22, %c0_23, %c0_24, %c0_25], %27 {strides = array<i32>} : memref<1x1x2x128xf32, #tpu.memory_space<vmem>>, vector<1x1x2x128xf32>,
    } else {
    }
    %c0 = arith.constant 0 : index
    %c0_1 = arith.constant 0 : index
    %c0_2 = arith.constant 0 : index
    %c0_3 = arith.constant 0 : index
    %3 = vector.load %arg3[%c0, %c0_1, %c0_2, %c0_3] : memref<1x4x2x128xf32, #tpu.memory_space<vmem>>, vector<1x4x2x128xf32>
    %c0_4 = arith.constant 0 : index
    %c0_5 = arith.constant 0 : index
    %c0_6 = arith.constant 0 : index
    %c0_7 = arith.constant 0 : index
    %4 = vector.load %arg4[%c0_4, %c0_5, %c0_6, %c0_7] : memref<1x1x2x128xi32, #tpu.memory_space<vmem>>, vector<1x1x2x128xi32>
    %cst = arith.constant dense<0xFF800000> : vector<1x2x128xf32>
    %5 = vector.multi_reduction <maximumf>, %3, %cst [1] : vector<1x4x2x128xf32> to vector<1x2x128xf32>
    %6 = vector.shape_cast %5 : vector<1x2x128xf32> to vector<1x1x2x128xf32>
    %7 = vector.broadcast %6 : vector<1x1x2x128xf32> to vector<1x4x2x128xf32>
    %8 = arith.subf %3, %7 : vector<1x4x2x128xf32>
    %9 = math.exp %8 : vector<1x4x2x128xf32>
    %cst_8 = arith.constant dense<0.000000e+00> : vector<1x2x128xf32>
    %10 = vector.multi_reduction <add>, %9, %cst_8 [1] : vector<1x4x2x128xf32> to vector<1x2x128xf32>
    %11 = vector.shape_cast %10 : vector<1x2x128xf32> to vector<1x1x2x128xf32>
    %12 = tpu.iota {dimensions = array<i32: 1>} : vector<1x4x2x128xi32>
    %13 = vector.broadcast %4 : vector<1x1x2x128xi32> to vector<1x4x2x128xi32>
    %14 = arith.cmpi eq, %12, %13 : vector<1x4x2x128xi32>
    %cst_9 = arith.constant 0.000000e+00 : f32
    %15 = vector.broadcast %cst_9 : f32 to vector<1x4x2x128xf32>
    %16 = arith.select %14, %8, %15 : vector<1x4x2x128xi1>, vector<1x4x2x128xf32>
    %cst_10 = arith.constant dense<0.000000e+00> : vector<1x2x128xf32>
    %17 = vector.multi_reduction <add>, %16, %cst_10 [1] : vector<1x4x2x128xf32> to vector<1x2x128xf32>
    %18 = vector.shape_cast %17 : vector<1x2x128xf32> to vector<1x1x2x128xf32>
    %19 = math.log %11 : vector<1x1x2x128xf32>
    %20 = arith.subf %19, %18 : vector<1x1x2x128xf32>
    %c0_11 = arith.constant 0 : index
    %c0_12 = arith.constant 0 : index
    %c0_13 = arith.constant 0 : index
    %c0_14 = arith.constant 0 : index
    %21 = vector.load %arg6[%c0_11, %c0_12, %c0_13, %c0_14] : memref<1x1x2x128xf32, #tpu.memory_space<vmem>>, vector<1x1x2x128xf32>
    %22 = arith.addf %21, %20 : vector<1x1x2x128xf32>
    %c0_15 = arith.constant 0 : index
    %c0_16 = arith.constant 0 : index
    %c0_17 = arith.constant 0 : index
    %c0_18 = arith.constant 0 : index
    %23 = vector.load %arg6[%c0_15, %c0_16, %c0_17, %c0_18] : memref<1x1x2x128xf32, #tpu.memory_space<vmem>>, vector<1x1x2x128xf32>
    tpu.vector_store %arg6[%c0_15, %c0_16, %c0_17, %c0_18], %22 {strides = array<i32>} : memref<1x1x2x128xf32, #tpu.memory_space<vmem>>, vector<1x1x2x128xf32>,
    %c0_i32_19 = arith.constant 0 : i32
    %24 = arith.cmpi eq, %arg2, %c0_i32_19 : i32
    %25 = arith.extui %24 : i1 to i32
    %c0_i32_20 = arith.constant 0 : i32
    %26 = arith.cmpi ne, %25, %c0_i32_20 : i32
    scf.if %26 {
      %c0_21 = arith.constant 0 : index
      %c0_22 = arith.constant 0 : index
      %c0_23 = arith.constant 0 : index
      %c0_24 = arith.constant 0 : index
      %27 = vector.load %arg6[%c0_21, %c0_22, %c0_23, %c0_24] : memref<1x1x2x128xf32, #tpu.memory_space<vmem>>, vector<1x1x2x128xf32>
      %28 = vector.shape_cast %27 : vector<1x1x2x128xf32> to vector<1x1x1x2x128xf32>
      %cst_25 = arith.constant dense<0.000000e+00> : vector<1xf32>
      %29 = vector.multi_reduction <add>, %28, %cst_25 [1, 2, 3, 4] : vector<1x1x1x2x128xf32> to vector<1xf32>
      %30 = vector.shape_cast %29 : vector<1xf32> to vector<1x1x1x1x1xf32>
      %31 = vector.extract %30[0, 0, 0, 0, 0] : f32 from vector<1x1x1x1x1xf32>
      %32 = vector.broadcast %31 : f32 to vector<1x1x1x1xf32>
      %c0_26 = arith.constant 0 : index
      %c0_27 = arith.constant 0 : index
      %c0_28 = arith.constant 0 : index
      %c0_29 = arith.constant 0 : index
      %33 = vector.load %arg5[%c0_26, %c0_27, %c0_28, %c0_29] : memref<1x1x1x1xf32, #tpu.memory_space<vmem>>, vector<1x1x1x1xf32>
      tpu.vector_store %arg5[%c0_26, %c0_27, %c0_28, %c0_29], %32 {strides = array<i32>} : memref<1x1x1x1xf32, #tpu.memory_space<vmem>>, vector<1x1x1x1xf32>,
    } else {
    }
    return
  }
  func.func @transform_0(%arg0: i32, %arg1: i32, %arg2: i32) -> (i32, i32, i32, i32) {
    %c1_i32 = arith.constant 1 : i32
    %0 = arith.muli %arg1, %c1_i32 : i32
    %1 = arith.addi %0, %arg2 : i32
    %c0_i32 = arith.constant 0 : i32
    %c0_i32_0 = arith.constant 0 : i32
    %c0_i32_1 = arith.constant 0 : i32
    return %arg0, %c0_i32, %1, %c0_i32_0 : i32, i32, i32, i32
  }
  func.func @transform_1(%arg0: i32, %arg1: i32, %arg2: i32) -> (i32, i32, i32, i32) {
    %c1_i32 = arith.constant 1 : i32
    %0 = arith.muli %arg1, %c1_i32 : i32
    %1 = arith.addi %0, %arg2 : i32
    %c0_i32 = arith.constant 0 : i32
    %c0_i32_0 = arith.constant 0 : i32
    %c0_i32_1 = arith.constant 0 : i32
    return %arg0, %c0_i32, %1, %c0_i32_0 : i32, i32, i32, i32
  }
  func.func @transform_2(%arg0: i32, %arg1: i32, %arg2: i32) -> (i32, i32, i32, i32) {
    %c0_i32 = arith.constant 0 : i32
    %c0_i32_0 = arith.constant 0 : i32
    %c0_i32_1 = arith.constant 0 : i32
    return %arg0, %arg1, %c0_i32, %c0_i32_0 : i32, i32, i32, i32
  }
}

</mosaic_0001>

<llo_original>
// kernel: cross_entropy_loss.1
$region0: #{cross_entropy_loss.1}
  #allocation0 [shape = 'u32[]', space=smem, size = 0x4, offset = 0x4, fixed_abs, tag = 'smem constant byte address 0x4 - core index']
  #allocation1 [shape = 'u32[144,128]{1,0:T(1,128)}', space=vmem, size = 0x12000, scoped, tag = 'internal scratch']
  #allocation2 [shape = 'f32[1,1,2,128]{3,2,1,0:T(2,128)}', space=vmem, size = 0x400, scoped, tag = 'scratch operand']
  %s0 = inlined_call_operand.vmem [shape: f32[2,4,2,128], index: 0, kind: input, shape index: {}]
  %s1 = inlined_call_operand.vmem [shape: s32[2,1,2,128], index: 1, kind: input, shape index: {}]
  %s2 = inlined_call_operand.vmem [shape: f32[2,1,1,1], index: 2, kind: output, shape index: {}]
  %s3 = sld [smem:[#allocation0]]
  $region49: #{cross_entropy_loss.1} parent=0
    _
  %s5 = ssub.s32 1, %s3
  %s6 = scalar_select 0, %s5, %s3
  loop: start=0, step=1, limit=4
  $region2: #{cross_entropy_loss.1} parent=0 // loop_pre_header
    _
  $region3: #{cross_entropy_loss.1} parent=0 // loop_header
    %s8 = sphi 0, %s12
    %p9 = scmp.ge.s32.totalorder %s8, 4
    %s15 = sphi 0, %s34
    %s16 = sphi 0, %s30
    %s17 = sphi 0, %s26
    %s18 = sphi 0, %s15
    %s19 = sphi 0, %s16
    %s20 = sphi 0, %s17
    %s21 = sphi 0, %s18
    %s22 = sphi 0, %s19
    %s23 = sphi 0, %s20
    %s41 = sphi 0, %s43
    %s44 = sphi 0, %s41
    %s45 = sphi 0, %s44
    %s61 = sphi 0, %s45
    %s71 = sphi 0, %s73
    %s74 = sphi 0, %s71
    %s75 = sphi 0, %s74
    %s91 = sphi 0, %s75
    %s99 = sphi 0, %s101
    %s102 = sphi 0, %s99
    %s103 = sphi 0, %s102
    %s119 = sphi 0, %s103
  $region4: #{cross_entropy_loss.1} parent=0 // loop_header_branch
    %11 = sbr.rel (%p9) target = $region8
  $region5: #{cross_entropy_loss.1} parent=0 // loop_body
    %s13 = ssub.s32 %s8, 1
    %s14 = ssub.s32 %s8, 2
    %s24 = sadd.s32 1, %s17
    %p25 = scmp.ge.s32.totalorder %s24, 1
    %s26 = scalar_select %p25, 0, %s24
    %s27 = sadd.s32 1, %s16
    %s28 = scalar_select %p25, %s27, %s16
    %p29 = scmp.ge.s32.totalorder %s28, 1
    %s30 = scalar_select %p29, 0, %s28
    %s31 = sadd.s32 1, %s15
    %s32 = scalar_select %p29, %s31, %s15
    %p33 = scmp.ge.s32.totalorder %s32, 2
    %s34 = scalar_select %p33, 0, %s32
    %s35 = sadd.s32 %s16, %s17
    %s36 = sadd.s32 %s30, %s26
    %s37 = ssub.s32 %s15, %s34
    %s38 = ssub.s32 %s35, %s36
    %s39 = sor.u32 %s37, %s38
    %p40 = scmp.eq.s32.totalorder %s39, 0
    %s42 = sadd.s32 %s41, 1
    %s43 = scalar_select %p40, %s41, %s42
    %p46 = pneg %p40
    %p47 = scmp.eq.s32.totalorder %s8, 1
    %p48 = por %p46, %p47
    %p49 = scmp.ne.s32.totalorder %s41, %s44
    %p50 = scmp.eq.s32.totalorder %s8, 0
    %p51 = por %p49, %p50
    %p52 = scmp.ne.s32.totalorder %s41, %s44
    %p53 = scmp.eq.s32.totalorder %s13, 1
    %p54 = por %p52, %p53
    %p55 = scmp.ne.s32.totalorder %s44, %s45
    %p56 = scmp.eq.s32.totalorder %s13, 0
    %p57 = por %p55, %p56
    %p58 = scmp.ne.s32.totalorder %s44, %s45
    %p59 = scmp.eq.s32.totalorder %s14, 1
    %p60 = por %p58, %p59
    %p62 = scmp.ne.s32.totalorder %s45, %s61
    %p63 = scmp.eq.s32.totalorder %s14, 0
    %p64 = por %p62, %p63
    %s65 = sadd.s32 %s16, %s17
    %s66 = sadd.s32 %s30, %s26
    %s67 = ssub.s32 %s15, %s34
    %s68 = ssub.s32 %s65, %s66
    %s69 = sor.u32 %s67, %s68
    %p70 = scmp.eq.s32.totalorder %s69, 0
    %s72 = sadd.s32 %s71, 1
    %s73 = scalar_select %p70, %s71, %s72
    %p76 = pneg %p70
    %p77 = scmp.eq.s32.totalorder %s8, 1
    %p78 = por %p76, %p77
    %p79 = scmp.ne.s32.totalorder %s71, %s74
    %p80 = scmp.eq.s32.totalorder %s8, 0
    %p81 = por %p79, %p80
    %p82 = scmp.ne.s32.totalorder %s71, %s74
    %p83 = scmp.eq.s32.totalorder %s13, 1
    %p84 = por %p82, %p83
    %p85 = scmp.ne.s32.totalorder %s74, %s75
    %p86 = scmp.eq.s32.totalorder %s13, 0
    %p87 = por %p85, %p86
    %p88 = scmp.ne.s32.totalorder %s74, %s75
    %p89 = scmp.eq.s32.totalorder %s14, 1
    %p90 = por %p88, %p89
    %p92 = scmp.ne.s32.totalorder %s75, %s91
    %p93 = scmp.eq.s32.totalorder %s14, 0
    %p94 = por %p92, %p93
    %s95 = ssub.s32 %s15, %s34
    %s96 = ssub.s32 %s16, %s30
    %s97 = sor.u32 %s95, %s96
    %p98 = scmp.eq.s32.totalorder %s97, 0
    %s100 = sadd.s32 %s99, 1
    %s101 = scalar_select %p98, %s99, %s100
    %p104 = pneg %p98
    %p105 = scmp.eq.s32.totalorder %s8, 1
    %p106 = por %p104, %p105
    %p107 = scmp.ne.s32.totalorder %s99, %s102
    %p108 = scmp.eq.s32.totalorder %s8, 0
    %p109 = por %p107, %p108
    %p110 = scmp.ne.s32.totalorder %s99, %s102
    %p111 = scmp.eq.s32.totalorder %s13, 1
    %p112 = por %p110, %p111
    %p113 = scmp.ne.s32.totalorder %s102, %s103
    %p114 = scmp.eq.s32.totalorder %s13, 0
    %p115 = por %p113, %p114
    %p116 = scmp.ne.s32.totalorder %s102, %s103
    %p117 = scmp.eq.s32.totalorder %s14, 1
    %p118 = por %p116, %p117
    %p120 = scmp.ne.s32.totalorder %s103, %s119
    %p121 = scmp.eq.s32.totalorder %s14, 0
    %p122 = por %p120, %p121
    %p123 = scmp.le.s32.totalorder 1, %s8
    %p124 = scmp.lt.s32.totalorder %s8, 3
    %p125 = pnand %p123, %p124
    %p126 = pneg %p125
    // Predicated region
    $region9: #{cross_entropy_loss.1} parent=5 // pred_check
      _
    $region10: #{cross_entropy_loss.1} parent=5 // pred_check_branch
      %128 = sbr.rel (%p125) target = $region12
    $region11: #{cross_entropy_loss.1} parent=5 // pred_region
      %s129 = ssub.s32 %s8, 1
    $region12: #{cross_entropy_loss.1} parent=5 // pred_fallthru
      _
    %p130 = scmp.lt.s32.totalorder %s8, 2
    // Predicated region
    $region13: #{cross_entropy_loss.1} parent=5 // pred_check
      %p131 = pneg %p130
    $region14: #{cross_entropy_loss.1} parent=5 // pred_check_branch
      %133 = sbr.rel (%p131) target = $region16
    $region15: #{cross_entropy_loss.1} parent=5 // pred_region
      // Predicated region
      $region17: #{cross_entropy_loss.1} parent=15 // pred_check
        %p134 = pneg %p51
      $region18: #{cross_entropy_loss.1} parent=15 // pred_check_branch
        %136 = sbr.rel (%p134) target = $region20
      $region19: #{cross_entropy_loss.1} parent=15 // pred_region
        %s137 = sadd.s32 %s16, %s17
        %p138 = scmp.lt.s32.totalorder %s15, 1
        %s139 = scalar_select %p138, %s15, 1
        %p140 = scmp.lt.s32.totalorder %s137, 0
        %s141 = scalar_select %p140, %s137, 0
        %s142 = smul.addr %s139, 4
        %s143 = sadd.s32 %s141, %s142
        %s144 = smul.addr %s143, 2
        %s145 = scalar_lea.vmem %s0, %s144
        %s146 = sadd.s32 %s16, %s17
      $region20: #{cross_entropy_loss.1} parent=15 // pred_fallthru
        _
      // Predicated region
      $region21: #{cross_entropy_loss.1} parent=15 // pred_check
        %p147 = pneg %p81
      $region22: #{cross_entropy_loss.1} parent=15 // pred_check_branch
        %149 = sbr.rel (%p147) target = $region24
      $region23: #{cross_entropy_loss.1} parent=15 // pred_region
        %s150 = sadd.s32 %s16, %s17
        %p151 = scmp.lt.s32.totalorder %s15, 1
        %s152 = scalar_select %p151, %s15, 1
        %p153 = scmp.lt.s32.totalorder %s150, 0
        %s154 = scalar_select %p153, %s150, 0
        %s155 = sadd.s32 %s154, %s152
        %s156 = smul.addr %s155, 2
        %s157 = scalar_lea.vmem %s1, %s156
        %s158 = sadd.s32 %s16, %s17
      $region24: #{cross_entropy_loss.1} parent=15 // pred_fallthru
        _
    $region16: #{cross_entropy_loss.1} parent=5 // pred_fallthru
      _
    %p159 = scmp.le.s32.totalorder 1, %s8
    %p160 = scmp.lt.s32.totalorder %s8, 3
    %p161 = pnand %p159, %p160
    %p162 = pneg %p161
    // Predicated region
    $region25: #{cross_entropy_loss.1} parent=5 // pred_check
      _
    $region26: #{cross_entropy_loss.1} parent=5 // pred_check_branch
      %164 = sbr.rel (%p161) target = $region28
    $region27: #{cross_entropy_loss.1} parent=5 // pred_region
      %s165 = ssub.s32 %s8, 1
      %s166 = sadd.s32 %s19, %s20
      %p167 = scmp.lt.s32.totalorder %s18, 1
      %s168 = scalar_select %p167, %s18, 1
      %p169 = scmp.lt.s32.totalorder %s166, 0
      %s170 = scalar_select %p169, %s166, 0
      %s171 = smul.addr %s168, 4
      %s172 = sadd.s32 %s170, %s171
      %s173 = smul.addr %s172, 2
      %s174 = scalar_lea.vmem %s0, %s173
      %p175 = pneg %p57
      %p176 = pneg %p54
      %s177 = sadd.s32 %s19, %s20
      %p178 = scmp.lt.s32.totalorder %s18, 1
      %s179 = scalar_select %p178, %s18, 1
      %p180 = scmp.lt.s32.totalorder %s177, 0
      %s181 = scalar_select %p180, %s177, 0
      %s182 = sadd.s32 %s181, %s179
      %s183 = smul.addr %s182, 2
      %s184 = scalar_lea.vmem %s1, %s183
      %p185 = pneg %p87
      %p186 = pneg %p84
      %p187 = pneg %p115
      %p188 = pneg %p112
      %p189 = scmp.lt.s32.totalorder %s18, 1
      %s190 = scalar_select %p189, %s18, 1
      %p191 = scmp.lt.s32.totalorder %s19, 0
      %s192 = scalar_select %p191, %s19, 0
      %s193 = sadd.s32 %s192, %s190
      %s194 = scalar_lea.vmem %s2, %s193
      %s195 = sadd.s32 %s19, %s20
      %p196 = scmp.lt.s32.totalorder %s18, 1
      %s197 = scalar_select %p196, %s18, 1
      %p198 = scmp.lt.s32.totalorder %s195, 0
      %s199 = scalar_select %p198, %s195, 0
      %s200 = smul.addr %s197, 4
      %s201 = sadd.s32 %s199, %s200
      %s202 = smul.addr %s201, 2
      %s203 = scalar_lea.vmem %s0, %s202
      %s204 = sadd.s32 %s19, %s20
      %s205 = sadd.s32 %s19, %s20
      %p206 = scmp.lt.s32.totalorder %s18, 1
      %s207 = scalar_select %p206, %s18, 1
      %p208 = scmp.lt.s32.totalorder %s205, 0
      %s209 = scalar_select %p208, %s205, 0
      %s210 = sadd.s32 %s209, %s207
      %s211 = smul.addr %s210, 2
      %s212 = scalar_lea.vmem %s1, %s211
      %s213 = sadd.s32 %s19, %s20
      %p214 = scmp.lt.s32.totalorder %s18, 1
      %s215 = scalar_select %p214, %s18, 1
      %p216 = scmp.lt.s32.totalorder %s19, 0
      %s217 = scalar_select %p216, %s19, 0
      %s218 = sadd.s32 %s217, %s215
      %s219 = scalar_lea.vmem %s2, %s218
      %p220 = scmp.eq.s32.totalorder %s20, 0
      // Predicated region
      $region29: #{cross_entropy_loss.1} parent=27 // pred_check
        %p221 = pneg %p220
      $region30: #{cross_entropy_loss.1} parent=27 // pred_check_branch
        %223 = sbr.rel (%p221) target = $region32
      $region31: #{cross_entropy_loss.1} parent=27 // pred_region
        %224 = vst [vmem:[#allocation2] sm:$0x3] 0.0
      $region32: #{cross_entropy_loss.1} parent=27 // pred_fallthru
        _
      %v225 = vld [vmem:[%s203] sm:$0x3]
      %v226 = vld [vmem:[%s203 + $0x2] sm:$0x3]
      %v227 = vld [vmem:[%s203 + $0x4] sm:$0x3]
      %v228 = vld [vmem:[%s203 + $0x6] sm:$0x3]
      %v229 = vld [vmem:[%s212] sm:$0x3]
      %vm230 = vcmask 1041408
      %v231 = vsel %vm230, %v225, -inf
      %v232 = vsel %vm230, %v226, -inf
      %v233 = vsel %vm230, %v227, -inf
      %v234 = vsel %vm230, %v228, -inf
      %v235 = vmax.f32 %v231, %v232
      %v236 = vmax.f32 %v233, %v234
      %v237 = vmax.f32 %v235, %v236
      %v238 = vsub.f32 %v225, %v237
      %v239 = vsub.f32 %v226, %v237
      %v240 = vsub.f32 %v227, %v237
      %v241 = vsub.f32 %v228, %v237
      %v242 = vmul.f32 %v238, 1.442695
      %v243 = vpow.pop %v242
      %v244 = vmul.f32 %v239, 1.442695
      %v245 = vpow.pop %v244
      %v246 = vmul.f32 %v240, 1.442695
      %v247 = vpow.pop %v246
      %v248 = vmul.f32 %v241, 1.442695
      %v249 = vpow.pop %v248
      %v250 = vsel %vm230, %v243, 0.0
      %v251 = vsel %vm230, %v245, 0.0
      %v252 = vadd.f32 %v250, %v251
      %v253 = vsel %vm230, %v247, 0.0
      %v254 = vadd.f32 %v252, %v253
      %v255 = vsel %vm230, %v249, 0.0
      %v256 = vadd.f32 %v254, %v255
      %vm257 = vcmp.eq.s32.totalorder %v229, 0
      %vm258 = vcmp.eq.s32.totalorder %v229, 1
      %vm259 = vcmp.eq.s32.totalorder %v229, 2
      %vm260 = vcmp.eq.s32.totalorder %v229, 3
      %v261 = vsel %vm257, %v238, 0.0
      %v262 = vsel %vm258, %v239, 0.0
      %v263 = vsel %vm259, %v240, 0.0
      %v264 = vsel %vm260, %v241, 0.0
      %v265 = vsel %vm230, %v261, 0.0
      %v266 = vsel %vm230, %v262, 0.0
      %v267 = vadd.f32 %v265, %v266
      %v268 = vsel %vm230, %v263, 0.0
      %v269 = vadd.f32 %v267, %v268
      %v270 = vsel %vm230, %v264, 0.0
      %v271 = vadd.f32 %v269, %v270
      %v272 = vlog2.pop %v256
      %v273 = vmul.f32 %v272, 0.6931472
      %v274 = vsub.f32 %v273, %v271
      %v275 = vld [vmem:[#allocation2] sm:$0x3]
      %v276 = vadd.f32 %v275, %v274
      %277 = vst [vmem:[#allocation2] sm:$0x3] %v276
      // Predicated region
      $region33: #{cross_entropy_loss.1} parent=27 // pred_check
        %p278 = pneg %p220
      $region34: #{cross_entropy_loss.1} parent=27 // pred_check_branch
        %280 = sbr.rel (%p278) target = $region36
      $region35: #{cross_entropy_loss.1} parent=27 // pred_region
        %v281 = vld [vmem:[#allocation2] sm:$0x3]
        %v282 = vsel %vm230, %v281, 0.0
        %283 = vadd.xlane.f32.xlu0 %v282
        %v284 = vpop.xlane.xlu0 %283
        %v285 = vrot.slane %v284, 4
        %v286 = vadd.f32 %v284, %v285
        %v287 = vrot.slane %v286, 2
        %v288 = vadd.f32 %v286, %v287
        %v289 = vrot.slane %v288, 1
        %v290 = vadd.f32 %v288, %v289
        %s291 = vtos %v290
        %v292 = vstv %s291
        %vm293 = vcmask 0
        %294 = vst.msk [vmem:[%s219] sm:$0x1] %vm293, %v292
      $region36: #{cross_entropy_loss.1} parent=27 // pred_fallthru
        _
      %p295 = scmp.lt.s32.totalorder %s18, 1
      %s296 = scalar_select %p295, %s18, 1
      %p297 = scmp.lt.s32.totalorder %s19, 0
      %s298 = scalar_select %p297, %s19, 0
      %s299 = sadd.s32 %s298, %s296
      %s300 = scalar_lea.vmem %s2, %s299
      // Predicated region
      $region37: #{cross_entropy_loss.1} parent=27 // pred_check
        %p301 = pneg %p112
      $region38: #{cross_entropy_loss.1} parent=27 // pred_check_branch
        %303 = sbr.rel (%p301) target = $region40
      $region39: #{cross_entropy_loss.1} parent=27 // pred_region
        _
      $region40: #{cross_entropy_loss.1} parent=27 // pred_fallthru
        _
    $region28: #{cross_entropy_loss.1} parent=5 // pred_fallthru
      _
    %p304 = scmp.le.s32.totalorder 2, %s8
    // Predicated region
    $region41: #{cross_entropy_loss.1} parent=5 // pred_check
      %p305 = pneg %p304
    $region42: #{cross_entropy_loss.1} parent=5 // pred_check_branch
      %307 = sbr.rel (%p305) target = $region44
    $region43: #{cross_entropy_loss.1} parent=5 // pred_region
      %s308 = ssub.s32 %s8, 2
      // Predicated region
      $region45: #{cross_entropy_loss.1} parent=43 // pred_check
        %p309 = pneg %p118
      $region46: #{cross_entropy_loss.1} parent=43 // pred_check_branch
        %311 = sbr.rel (%p309) target = $region48
      $region47: #{cross_entropy_loss.1} parent=43 // pred_region
        %p312 = scmp.lt.s32.totalorder %s21, 1
        %s313 = scalar_select %p312, %s21, 1
        %p314 = scmp.lt.s32.totalorder %s22, 0
        %s315 = scalar_select %p314, %s22, 0
        %s316 = sadd.s32 %s315, %s313
        %s317 = scalar_lea.vmem %s2, %s316
      $region48: #{cross_entropy_loss.1} parent=43 // pred_fallthru
        _
    $region44: #{cross_entropy_loss.1} parent=5 // pred_fallthru
      _
  $region6: #{cross_entropy_loss.1} parent=0 // loop_footer
    %s12 = sadd.s32 1, %s8
  $region7: #{cross_entropy_loss.1} parent=0 // loop_footer_branch
    %7 = sbr.rel target = $region3
  $region8: #{cross_entropy_loss.1} parent=0 // loop_exit
    _

</llo_original>
